<compile_context>
chip_gen: v7x
topology: tpu7x:2x2x1
jax: 0.10.0
libtpu: 0.0.40
codegen_flags: <defaults>
</compile_context>

<pallas_src>
import functools

import jax
import jax.numpy as jnp
from jax.experimental import pallas as pl
from jax.experimental.pallas import tpu as pltpu


def _make_divisible(v, divisor, min_value=None):
    if min_value is None:
        min_value = divisor
    new_v = max(min_value, int(v + divisor / 2) // divisor * divisor)
    if new_v < 0.9 * v:
        new_v += divisor
    return new_v


def _cdiv(a, b):
    return -(-a // b)


def _vmem_capacity_bytes():
    """Per-TensorCore VMEM capacity; conservative fallback if unqueryable."""
    try:
        return int(pltpu.get_tpu_info().vmem_capacity_bytes)
    except Exception:
        return 64 * 1024 * 1024  # v7x per-TC size (smallest of v5e/v6e/v7x)


def se_kernel(x_ref, w1_ref, b1_ref, w2_ref, b2_ref, o_ref, *, inv_hw):
    # x_ref: (TB, C, HW) block. Rows are independent, so a partial last batch
    # block (garbage rows) cannot contaminate valid outputs.

    # --- squeeze: global average pool, f32 accumulation without a full f32
    #     copy of the tile ---
    y = jnp.sum(x_ref[...], axis=-1, dtype=jnp.float32) * inv_hw       # (TB, C)

    # --- fc1 + ReLU (f32; tiny vs. the streaming tile, MXU has huge slack) ---
    h = jnp.dot(y, w1_ref[...].astype(jnp.float32),
                preferred_element_type=jnp.float32)
    h = jnp.maximum(h + b1_ref[...].astype(jnp.float32), 0.0)          # (TB, hidden)

    # --- fc2 + h_sigmoid: relu6(s + 3) / 6 (f32) ---
    s = jnp.dot(h, w2_ref[...].astype(jnp.float32),
                preferred_element_type=jnp.float32)
    s = s + b2_ref[...].astype(jnp.float32)
    s = jnp.clip(s + 3.0, 0.0, 6.0) * (1.0 / 6.0)                      # (TB, C)

    # --- excite: single multiply + store in the I/O dtype (no f32 tile stage;
    #     matches PyTorch-in-that-dtype semantics for the rescale) ---
    o_ref[...] = x_ref[...] * s[:, :, None].astype(o_ref.dtype)


def _choose_tb(B, C, HW, elem_bytes, vmem_budget_bytes):
    """Batch tile: biggest that fits the budget with double-buffered in+out
    tiles, while keeping >= min(4, B) grid steps (2 v7x TensorCores x >=2
    steps each) and preferring an even step count for a balanced TC split."""
    per_b = 4 * C * HW * elem_bytes              # 2 bufs x (in + out) per row
    tb = max(1, min(B, int(vmem_budget_bytes // per_b)))

    target_steps = min(4, B)
    while tb > 1 and _cdiv(B, tb) < target_steps:
        tb -= 1

    steps = _cdiv(B, tb)
    if tb > 1 and steps % 2 == 1:
        for cand in range(tb - 1, 0, -1):
            cs = _cdiv(B, cand)
            if cs % 2 == 0 and cs <= 2 * steps:
                tb = cand
                break
    return tb


def se_layer(x, w1, b1, w2, b2, *, vmem_budget_bytes=None):
    """x: (B, C, H, W). Weights stored as w1: (C, hidden), w2: (hidden, C)."""
    B, C, H, W = x.shape
    HW = H * W
    hidden = w1.shape[1]
    elem = jnp.dtype(x.dtype).itemsize
    w_elem = jnp.dtype(w1.dtype).itemsize

    cap = _vmem_capacity_bytes()
    if vmem_budget_bytes is None:
        # ~half of physical VMEM for the streaming tiles: 32 MiB on v7x,
        # 64 MiB on v5e/v6e (leaves room for weights + compiler scratch).
        vmem_budget_bytes = cap // 2

    # Un-padded flattened view; block's last two dims equal the full array
    # dims, so no (8,128) padding and no extra pad/slice HBM passes.
    x_flat = x.reshape(B, C, HW)

    tb = _choose_tb(B, C, HW, elem, vmem_budget_bytes)
    grid = (_cdiv(B, tb),)

    b1_2d = b1.reshape(1, hidden)
    b2_2d = b2.reshape(1, C)

    data_bytes = 4 * tb * C * HW * elem                       # dbl-buffered in+out
    weight_bytes = (C * hidden + hidden * C + hidden + C) * w_elem
    vmem_limit = int(min(
        max(int((data_bytes + 2 * weight_bytes) * 1.25) + (4 << 20), 16 << 20),
        int(cap * 0.75),                                      # never exceed chip VMEM
    ))

    cost = pl.CostEstimate(
        flops=int(4 * B * C * hidden + 2 * B * C * HW + 8 * B * C),
        transcendentals=0,
        bytes_accessed=int(2 * B * C * HW * elem + weight_bytes),
    )

    kernel = functools.partial(se_kernel, inv_hw=1.0 / HW)

    out_flat = pl.pallas_call(
        kernel,
        out_shape=jax.ShapeDtypeStruct((B, C, HW), x.dtype),
        grid_spec=pltpu.PrefetchScalarGridSpec(
            num_scalar_prefetch=0,
            grid=grid,
            in_specs=[
                pl.BlockSpec((tb, C, HW), lambda i: (i, 0, 0)),   # x
                pl.BlockSpec((C, hidden), lambda i: (0, 0)),      # w1
                pl.BlockSpec((1, hidden), lambda i: (0, 0)),      # b1
                pl.BlockSpec((hidden, C), lambda i: (0, 0)),      # w2
                pl.BlockSpec((1, C), lambda i: (0, 0)),           # b2
            ],
            out_specs=pl.BlockSpec((tb, C, HW), lambda i: (i, 0, 0)),
        ),
        compiler_params=pltpu.CompilerParams(
            dimension_semantics=("parallel",),
            vmem_limit_bytes=vmem_limit,
        ),
        cost_estimate=cost,
    )(x_flat, w1, b1_2d, w2, b2_2d)

    return out_flat.reshape(B, C, H, W)

    # TODO(synk): for stem-sized feature maps where even a single (1, C, HW)
    # tile exceeds the VMEM budget, split into a reduce phase tiled over HW
    # (channel-sum accumulator with pl.when init/finalize) followed by an
    # HW-tiled excite phase; that also gives v7x a second parallel axis when
    # B is tiny.


def se_layer_ref(x, w1, b1, w2, b2):
    """Plain-JAX reference matching the PyTorch forward."""
    xf = x.astype(jnp.float32)
    y = jnp.mean(xf, axis=(2, 3))                            # (B, C)
    h = jnp.maximum(y @ w1.astype(jnp.float32) + b1, 0.0)    # (B, hidden)
    s = h @ w2.astype(jnp.float32) + b2                      # (B, C)
    s = jnp.clip(s + 3.0, 0.0, 6.0) / 6.0
    return (xf * s[:, :, None, None]).astype(x.dtype)


if __name__ == "__main__":
    B, C = 2, 16
    reduction = 4
    hidden = _make_divisible(C // reduction, 8)              # = 8

    key = jax.random.PRNGKey(0)
    kx, k1, k2, k3, k4, kx2 = jax.random.split(key, 6)

    # nn.Linear(channel, hidden): weight (hidden, channel) -> stored as (C, hidden)
    w1 = jax.random.normal(k1, (C, hidden), dtype=jnp.float32) * 0.1
    b1 = jax.random.normal(k2, (hidden,), dtype=jnp.float32) * 0.1
    # nn.Linear(hidden, channel): stored as (hidden, C)
    w2 = jax.random.normal(k3, (hidden, C), dtype=jnp.float32) * 0.1
    b2 = jax.random.normal(k4, (C,), dtype=jnp.float32) * 0.1

    # Case 1: 16x16 spatial, f32 I/O.
    x = jax.random.normal(kx, (B, C, 16, 16), dtype=jnp.float32)
    out = jax.block_until_ready(se_layer(x, w1, b1, w2, b2))
    ref = se_layer_ref(x, w1, b1, w2, b2)
    assert out.shape == x.shape
    assert jnp.allclose(out, ref, atol=1e-5, rtol=1e-5), "mismatch (16x16, f32)"

    # Case 2: 7x7 spatial (real MobileNetV3 tail) -> un-padded HW=49, masked stores.
    x7 = jax.random.normal(kx2, (B, C, 7, 7), dtype=jnp.float32)
    out7 = jax.block_until_ready(se_layer(x7, w1, b1, w2, b2))
    ref7 = se_layer_ref(x7, w1, b1, w2, b2)
    assert out7.shape == x7.shape
    assert jnp.allclose(out7, ref7, atol=1e-5, rtol=1e-5), "mismatch (7x7, f32)"

    # Case 3: bf16 I/O (halves HBM traffic; FC path still accumulates in f32).
    xb = x.astype(jnp.bfloat16)
    outb = jax.block_until_ready(se_layer(xb, w1, b1, w2, b2))
    refb = se_layer_ref(xb, w1, b1, w2, b2)
    assert outb.dtype == jnp.bfloat16
    assert jnp.allclose(outb.astype(jnp.float32), refb.astype(jnp.float32),
                        atol=3e-2, rtol=3e-2), "mismatch (16x16, bf16)"

    print("KERNEL_OK")
</pallas_src>

<mosaic_0001>
module attributes {stable_mosaic.version = 11 : i64} {
  func.func @se_kernel(%arg0: i32, %arg1: memref<1x16x256xf32, #tpu.memory_space<vmem>>, %arg2: memref<16x8xf32, #tpu.memory_space<vmem>>, %arg3: memref<1x8xf32, #tpu.memory_space<vmem>>, %arg4: memref<8x16xf32, #tpu.memory_space<vmem>>, %arg5: memref<1x16xf32, #tpu.memory_space<vmem>>, %arg6: memref<1x16x256xf32, #tpu.memory_space<vmem>>) attributes {dimension_semantics = [#tpu.dimension_semantics<parallel>], iteration_bounds = array<i64: 2>, scalar_prefetch = 0 : i64, scratch_operands = 0 : i64, tpu.core_type = #tpu.core_type<tc>, window_params = [{transform_indices = @transform_0, window_bounds = array<i64: 1, 16, 256>}, {pipeline_mode = #tpu.pipeline_mode<synchronous>, transform_indices = @transform_1, window_bounds = array<i64: 16, 8>}, {pipeline_mode = #tpu.pipeline_mode<synchronous>, transform_indices = @transform_2, window_bounds = array<i64: 1, 8>}, {pipeline_mode = #tpu.pipeline_mode<synchronous>, transform_indices = @transform_3, window_bounds = array<i64: 8, 16>}, {pipeline_mode = #tpu.pipeline_mode<synchronous>, transform_indices = @transform_4, window_bounds = array<i64: 1, 16>}, {transform_indices = @transform_5, window_bounds = array<i64: 1, 16, 256>}]} {
    %c0 = arith.constant 0 : index
    %c0_0 = arith.constant 0 : index
    %c0_1 = arith.constant 0 : index
    %0 = vector.load %arg1[%c0, %c0_0, %c0_1] : memref<1x16x256xf32, #tpu.memory_space<vmem>>, vector<1x16x256xf32>
    %cst = arith.constant dense<0.000000e+00> : vector<1x16xf32>
    %1 = vector.multi_reduction <add>, %0, %cst [2] : vector<1x16x256xf32> to vector<1x16xf32>
    %cst_2 = arith.constant 3.906250e-03 : f32
    %2 = vector.broadcast %cst_2 : f32 to vector<1x16xf32>
    %3 = arith.mulf %1, %2 : vector<1x16xf32>
    %c0_3 = arith.constant 0 : index
    %c0_4 = arith.constant 0 : index
    %4 = vector.load %arg2[%c0_3, %c0_4] : memref<16x8xf32, #tpu.memory_space<vmem>>, vector<16x8xf32>
    %cst_5 = arith.constant dense<0.000000e+00> : vector<1x8xf32>
    %5 = tpu.matmul %3, %4, %cst_5 {dimension_numbers = #tpu.dot_dimension_numbers<[1], [0], [0], [1], [0, 0, 1, 1], [], []>} : vector<1x16xf32>, vector<16x8xf32>, vector<1x8xf32> -> vector<1x8xf32>
    %c0_6 = arith.constant 0 : index
    %c0_7 = arith.constant 0 : index
    %6 = vector.load %arg3[%c0_6, %c0_7] : memref<1x8xf32, #tpu.memory_space<vmem>>, vector<1x8xf32>
    %7 = arith.addf %5, %6 : vector<1x8xf32>
    %cst_8 = arith.constant 0.000000e+00 : f32
    %8 = vector.broadcast %cst_8 : f32 to vector<1x8xf32>
    %9 = arith.maximumf %7, %8 : vector<1x8xf32>
    %c0_9 = arith.constant 0 : index
    %c0_10 = arith.constant 0 : index
    %10 = vector.load %arg4[%c0_9, %c0_10] : memref<8x16xf32, #tpu.memory_space<vmem>>, vector<8x16xf32>
    %cst_11 = arith.constant dense<0.000000e+00> : vector<1x16xf32>
    %11 = tpu.matmul %9, %10, %cst_11 {dimension_numbers = #tpu.dot_dimension_numbers<[1], [0], [0], [1], [0, 0, 1, 1], [], []>} : vector<1x8xf32>, vector<8x16xf32>, vector<1x16xf32> -> vector<1x16xf32>
    %c0_12 = arith.constant 0 : index
    %c0_13 = arith.constant 0 : index
    %12 = vector.load %arg5[%c0_12, %c0_13] : memref<1x16xf32, #tpu.memory_space<vmem>>, vector<1x16xf32>
    %13 = arith.addf %11, %12 : vector<1x16xf32>
    %cst_14 = arith.constant 3.000000e+00 : f32
    %14 = vector.broadcast %cst_14 : f32 to vector<1x16xf32>
    %15 = arith.addf %13, %14 : vector<1x16xf32>
    %cst_15 = arith.constant 0.000000e+00 : f32
    %cst_16 = arith.constant 6.000000e+00 : f32
    %16 = vector.broadcast %cst_15 : f32 to vector<1x16xf32>
    %17 = arith.maximumf %16, %15 : vector<1x16xf32>
    %18 = vector.broadcast %cst_16 : f32 to vector<1x16xf32>
    %19 = arith.minimumf %18, %17 : vector<1x16xf32>
    %cst_17 = arith.constant 0.166666672 : f32
    %20 = vector.broadcast %cst_17 : f32 to vector<1x16xf32>
    %21 = arith.mulf %19, %20 : vector<1x16xf32>
    %c0_18 = arith.constant 0 : index
    %c0_19 = arith.constant 0 : index
    %c0_20 = arith.constant 0 : index
    %22 = vector.load %arg1[%c0_18, %c0_19, %c0_20] : memref<1x16x256xf32, #tpu.memory_space<vmem>>, vector<1x16x256xf32>
    %23 = vector.shape_cast %21 : vector<1x16xf32> to vector<1x16x1xf32>
    %24 = vector.broadcast %23 : vector<1x16x1xf32> to vector<1x16x256xf32>
    %25 = arith.mulf %22, %24 : vector<1x16x256xf32>
    %c0_21 = arith.constant 0 : index
    %c0_22 = arith.constant 0 : index
    %c0_23 = arith.constant 0 : index
    %26 = vector.load %arg6[%c0_21, %c0_22, %c0_23] : memref<1x16x256xf32, #tpu.memory_space<vmem>>, vector<1x16x256xf32>
    tpu.vector_store %arg6[%c0_21, %c0_22, %c0_23], %25 {strides = array<i32>} : memref<1x16x256xf32, #tpu.memory_space<vmem>>, vector<1x16x256xf32>,
    return
  }
  func.func @transform_0(%arg0: i32) -> (i32, i32, i32) {
    %c0_i32 = arith.constant 0 : i32
    %c0_i32_0 = arith.constant 0 : i32
    %c0_i32_1 = arith.constant 0 : i32
    return %arg0, %c0_i32, %c0_i32_0 : i32, i32, i32
  }
  func.func @transform_1(%arg0: i32) -> (i32, i32) {
    %c0_i32 = arith.constant 0 : i32
    %c0_i32_0 = arith.constant 0 : i32
    %c0_i32_1 = arith.constant 0 : i32
    return %c0_i32, %c0_i32_0 : i32, i32
  }
  func.func @transform_2(%arg0: i32) -> (i32, i32) {
    %c0_i32 = arith.constant 0 : i32
    %c0_i32_0 = arith.constant 0 : i32
    %c0_i32_1 = arith.constant 0 : i32
    return %c0_i32, %c0_i32_0 : i32, i32
  }
  func.func @transform_3(%arg0: i32) -> (i32, i32) {
    %c0_i32 = arith.constant 0 : i32
    %c0_i32_0 = arith.constant 0 : i32
    %c0_i32_1 = arith.constant 0 : i32
    return %c0_i32, %c0_i32_0 : i32, i32
  }
  func.func @transform_4(%arg0: i32) -> (i32, i32) {
    %c0_i32 = arith.constant 0 : i32
    %c0_i32_0 = arith.constant 0 : i32
    %c0_i32_1 = arith.constant 0 : i32
    return %c0_i32, %c0_i32_0 : i32, i32
  }
  func.func @transform_5(%arg0: i32) -> (i32, i32, i32) {
    %c0_i32 = arith.constant 0 : i32
    %c0_i32_0 = arith.constant 0 : i32
    %c0_i32_1 = arith.constant 0 : i32
    return %arg0, %c0_i32, %c0_i32_0 : i32, i32, i32
  }
}

</mosaic_0001>

<llo_original>
// kernel: tpu_custom_call.1
$region0: #{tpu_custom_call.1}
  #allocation0 [shape = 'u32[]', space=smem, size = 0x4, offset = 0x4, fixed_abs, tag = 'smem constant byte address 0x4 - core index']
  #allocation1 [shape = 'u32[144,128]{1,0:T(1,128)}', space=vmem, size = 0x12000, scoped, tag = 'internal scratch']
  %s0 = inlined_call_operand.hbm [shape: f32[2,16,256], index: 0, kind: input, shape index: {}]
  %s1 = inlined_call_operand.vmem [shape: f32[16,8], index: 1, kind: input, shape index: {}]
  %s2 = inlined_call_operand.vmem [shape: f32[1,8], index: 2, kind: input, shape index: {}]
  %s3 = inlined_call_operand.vmem [shape: f32[8,16], index: 3, kind: input, shape index: {}]
  %s4 = inlined_call_operand.vmem [shape: f32[1,16], index: 4, kind: input, shape index: {}]
  %s5 = inlined_call_operand.hbm [shape: f32[2,16,256], index: 5, kind: output, shape index: {}]
  %s6 = sld [smem:[#allocation0]]
  $region57: #{tpu_custom_call.1} parent=0
    _
  %s8 = ssub.s32 1, %s6
  %s9 = scalar_select 0, %s8, %s6
  $region1: #{tpu_custom_call.1} parent=0
    #allocation2 [shape = 'u8[32768]{0}', space=vmem, size = 0x8000, scoped, tag = 'input window, operand 0']
    #allocation3 [shape = 's32[2]{0}', space=sflag, size = 0x8, scoped, tag = 'scoped memory for tpu_custom_call.1']
    #allocation4 [shape = 's32[2]{0}', space=sflag, size = 0x8, scoped, tag = 'scoped memory for tpu_custom_call.1']
    #allocation5 [shape = 'u8[32768]{0}', space=vmem, size = 0x8000, scoped, tag = 'output window, operand 0']
    %10 = vsyncpa [#allocation3], 0
    %s11 = scalar_lea.sflag [#allocation3], 1
    %12 = vsyncpa %s11, 0
    %13 = vsyncpa [#allocation4], 0
    %s14 = scalar_lea.sflag [#allocation4], 1
    %15 = vsyncpa %s14, 0
    loop: start=0, step=1, limit=4
    $region2: #{tpu_custom_call.1} parent=1 // loop_pre_header
      _
    $region3: #{tpu_custom_call.1} parent=1 // loop_header
      %s17 = sphi 0, %s21
      %p18 = scmp.ge.s32.totalorder %s17, 4
      %s27 = sphi 0, %s29
      %s30 = sphi 0, %s27
      %s31 = sphi 0, %s30
      %s47 = sphi 0, %s31
      %s51 = sphi 0, %s51
      %s53 = sphi 0, %s51
      %s54 = sphi 0, %s53
      %s68 = sphi 0, %s54
      %s72 = sphi 0, %s72
      %s74 = sphi 0, %s72
      %s75 = sphi 0, %s74
      %s89 = sphi 0, %s75
      %s93 = sphi 0, %s93
      %s95 = sphi 0, %s93
      %s96 = sphi 0, %s95
      %s110 = sphi 0, %s96
      %s114 = sphi 0, %s114
      %s116 = sphi 0, %s114
      %s117 = sphi 0, %s116
      %s131 = sphi 0, %s117
      %s137 = sphi 0, %s139
      %s140 = sphi 0, %s137
      %s141 = sphi 0, %s140
      %s157 = sphi 0, %s141
    $region4: #{tpu_custom_call.1} parent=1 // loop_header_branch
      %20 = sbr.rel (%p18) target = $region8
    $region5: #{tpu_custom_call.1} parent=1 // loop_body
      %s22 = ssub.s32 %s17, 1
      %s23 = ssub.s32 %s17, 2
      %s24 = sadd.s32 %s17, 1
      %s25 = ssub.s32 %s17, %s24
      %p26 = scmp.eq.s32.totalorder %s25, 0
      %s28 = sadd.s32 %s27, 1
      %s29 = scalar_select %p26, %s27, %s28
      %p32 = pneg %p26
      %p33 = scmp.eq.s32.totalorder %s17, 1
      %p34 = por %p32, %p33
      %p35 = scmp.ne.s32.totalorder %s27, %s30
      %p36 = scmp.eq.s32.totalorder %s17, 0
      %p37 = por %p35, %p36
      %p38 = scmp.ne.s32.totalorder %s27, %s30
      %p39 = scmp.eq.s32.totalorder %s22, 1
      %p40 = por %p38, %p39
      %p41 = scmp.ne.s32.totalorder %s30, %s31
      %p42 = scmp.eq.s32.totalorder %s22, 0
      %p43 = por %p41, %p42
      %p44 = scmp.ne.s32.totalorder %s30, %s31
      %p45 = scmp.eq.s32.totalorder %s23, 1
      %p46 = por %p44, %p45
      %p48 = scmp.ne.s32.totalorder %s31, %s47
      %p49 = scmp.eq.s32.totalorder %s23, 0
      %p50 = por %p48, %p49
      %s52 = sadd.s32 %s51, 1
      %p55 = scmp.eq.s32.totalorder %s17, 1
      %p56 = scmp.ne.s32.totalorder %s51, %s53
      %p57 = scmp.eq.s32.totalorder %s17, 0
      %p58 = por %p56, %p57
      %p59 = scmp.ne.s32.totalorder %s51, %s53
      %p60 = scmp.eq.s32.totalorder %s22, 1
      %p61 = por %p59, %p60
      %p62 = scmp.ne.s32.totalorder %s53, %s54
      %p63 = scmp.eq.s32.totalorder %s22, 0
      %p64 = por %p62, %p63
      %p65 = scmp.ne.s32.totalorder %s53, %s54
      %p66 = scmp.eq.s32.totalorder %s23, 1
      %p67 = por %p65, %p66
      %p69 = scmp.ne.s32.totalorder %s54, %s68
      %p70 = scmp.eq.s32.totalorder %s23, 0
      %p71 = por %p69, %p70
      %s73 = sadd.s32 %s72, 1
      %p76 = scmp.eq.s32.totalorder %s17, 1
      %p77 = scmp.ne.s32.totalorder %s72, %s74
      %p78 = scmp.eq.s32.totalorder %s17, 0
      %p79 = por %p77, %p78
      %p80 = scmp.ne.s32.totalorder %s72, %s74
      %p81 = scmp.eq.s32.totalorder %s22, 1
      %p82 = por %p80, %p81
      %p83 = scmp.ne.s32.totalorder %s74, %s75
      %p84 = scmp.eq.s32.totalorder %s22, 0
      %p85 = por %p83, %p84
      %p86 = scmp.ne.s32.totalorder %s74, %s75
      %p87 = scmp.eq.s32.totalorder %s23, 1
      %p88 = por %p86, %p87
      %p90 = scmp.ne.s32.totalorder %s75, %s89
      %p91 = scmp.eq.s32.totalorder %s23, 0
      %p92 = por %p90, %p91
      %s94 = sadd.s32 %s93, 1
      %p97 = scmp.eq.s32.totalorder %s17, 1
      %p98 = scmp.ne.s32.totalorder %s93, %s95
      %p99 = scmp.eq.s32.totalorder %s17, 0
      %p100 = por %p98, %p99
      %p101 = scmp.ne.s32.totalorder %s93, %s95
      %p102 = scmp.eq.s32.totalorder %s22, 1
      %p103 = por %p101, %p102
      %p104 = scmp.ne.s32.totalorder %s95, %s96
      %p105 = scmp.eq.s32.totalorder %s22, 0
      %p106 = por %p104, %p105
      %p107 = scmp.ne.s32.totalorder %s95, %s96
      %p108 = scmp.eq.s32.totalorder %s23, 1
      %p109 = por %p107, %p108
      %p111 = scmp.ne.s32.totalorder %s96, %s110
      %p112 = scmp.eq.s32.totalorder %s23, 0
      %p113 = por %p111, %p112
      %s115 = sadd.s32 %s114, 1
      %p118 = scmp.eq.s32.totalorder %s17, 1
      %p119 = scmp.ne.s32.totalorder %s114, %s116
      %p120 = scmp.eq.s32.totalorder %s17, 0
      %p121 = por %p119, %p120
      %p122 = scmp.ne.s32.totalorder %s114, %s116
      %p123 = scmp.eq.s32.totalorder %s22, 1
      %p124 = por %p122, %p123
      %p125 = scmp.ne.s32.totalorder %s116, %s117
      %p126 = scmp.eq.s32.totalorder %s22, 0
      %p127 = por %p125, %p126
      %p128 = scmp.ne.s32.totalorder %s116, %s117
      %p129 = scmp.eq.s32.totalorder %s23, 1
      %p130 = por %p128, %p129
      %p132 = scmp.ne.s32.totalorder %s117, %s131
      %p133 = scmp.eq.s32.totalorder %s23, 0
      %p134 = por %p132, %p133
      %s135 = ssub.s32 %s17, %s24
      %p136 = scmp.eq.s32.totalorder %s135, 0
      %s138 = sadd.s32 %s137, 1
      %s139 = scalar_select %p136, %s137, %s138
      %p142 = pneg %p136
      %p143 = scmp.eq.s32.totalorder %s17, 1
      %p144 = por %p142, %p143
      %p145 = scmp.ne.s32.totalorder %s137, %s140
      %p146 = scmp.eq.s32.totalorder %s17, 0
      %p147 = por %p145, %p146
      %p148 = scmp.ne.s32.totalorder %s137, %s140
      %p149 = scmp.eq.s32.totalorder %s22, 1
      %p150 = por %p148, %p149
      %p151 = scmp.ne.s32.totalorder %s140, %s141
      %p152 = scmp.eq.s32.totalorder %s22, 0
      %p153 = por %p151, %p152
      %p154 = scmp.ne.s32.totalorder %s140, %s141
      %p155 = scmp.eq.s32.totalorder %s23, 1
      %p156 = por %p154, %p155
      %p158 = scmp.ne.s32.totalorder %s141, %s157
      %p159 = scmp.eq.s32.totalorder %s23, 0
      %p160 = por %p158, %p159
      %p161 = scmp.le.s32.totalorder 1, %s17
      %p162 = scmp.lt.s32.totalorder %s17, 3
      %p163 = pnand %p161, %p162
      %p164 = pneg %p163
      // Predicated region
      $region9: #{tpu_custom_call.1} parent=5 // pred_check
        _
      $region10: #{tpu_custom_call.1} parent=5 // pred_check_branch
        %166 = sbr.rel (%p163) target = $region12
      $region11: #{tpu_custom_call.1} parent=5 // pred_region
        %s167 = ssub.s32 %s17, 1
        // Predicated region
        $region13: #{tpu_custom_call.1} parent=11 // pred_check
          %p168 = pneg %p64
        $region14: #{tpu_custom_call.1} parent=11 // pred_check_branch
          %170 = sbr.rel (%p168) target = $region16
        $region15: #{tpu_custom_call.1} parent=11 // pred_region
          _
        $region16: #{tpu_custom_call.1} parent=11 // pred_fallthru
          _
        // Predicated region
        $region17: #{tpu_custom_call.1} parent=11 // pred_check
          %p171 = pneg %p85
        $region18: #{tpu_custom_call.1} parent=11 // pred_check_branch
          %173 = sbr.rel (%p171) target = $region20
        $region19: #{tpu_custom_call.1} parent=11 // pred_region
          _
        $region20: #{tpu_custom_call.1} parent=11 // pred_fallthru
          _
        // Predicated region
        $region21: #{tpu_custom_call.1} parent=11 // pred_check
          %p174 = pneg %p106
        $region22: #{tpu_custom_call.1} parent=11 // pred_check_branch
          %176 = sbr.rel (%p174) target = $region24
        $region23: #{tpu_custom_call.1} parent=11 // pred_region
          _
        $region24: #{tpu_custom_call.1} parent=11 // pred_fallthru
          _
        // Predicated region
        $region25: #{tpu_custom_call.1} parent=11 // pred_check
          %p177 = pneg %p127
        $region26: #{tpu_custom_call.1} parent=11 // pred_check_branch
          %179 = sbr.rel (%p177) target = $region28
        $region27: #{tpu_custom_call.1} parent=11 // pred_region
          _
        $region28: #{tpu_custom_call.1} parent=11 // pred_fallthru
          _
      $region12: #{tpu_custom_call.1} parent=5 // pred_fallthru
        _
      %p180 = scmp.lt.s32.totalorder %s17, 2
      // Predicated region
      $region29: #{tpu_custom_call.1} parent=5 // pred_check
        %p181 = pneg %p180
      $region30: #{tpu_custom_call.1} parent=5 // pred_check_branch
        %183 = sbr.rel (%p181) target = $region32
      $region31: #{tpu_custom_call.1} parent=5 // pred_region
        // Predicated region
        $region33: #{tpu_custom_call.1} parent=31 // pred_check
          %p184 = pneg %p37
        $region34: #{tpu_custom_call.1} parent=31 // pred_check_branch
          %186 = sbr.rel (%p184) target = $region36
        $region35: #{tpu_custom_call.1} parent=31 // pred_region
          %s187 = sand.u32 %s27, 1
          %s188 = scalar_lea.sflag [#allocation3], %s187
          %s189 = sand.u32 %s27, 1
          %s190 = smul.addr %s189, 32
          %s191 = scalar_lea.vmem [#allocation2], %s190
          %s193 = ssub.s32 512, 512
          %194 = vsyncadd %s188, %s193
          %s195 = smul.addr %s17, 4
          %s196 = smul.addr %s195, 128
          %s197 = scalar_lea.hbm %s0, %s196
          %s198 = sshll.u32 %s191, 4
          %s199 = int_to_ptr.vmem [resolvable:$true] %s198
          %204 = dma.hbm_to_vmem [thread:$0]  %s197, 512, %s199, %s188, 256, 256, 16
        $region36: #{tpu_custom_call.1} parent=31 // pred_fallthru
          _
      $region32: #{tpu_custom_call.1} parent=5 // pred_fallthru
        _
      %p205 = scmp.le.s32.totalorder 1, %s17
      %p206 = scmp.lt.s32.totalorder %s17, 3
      %p207 = pnand %p205, %p206
      %p208 = pneg %p207
      // Predicated region
      $region37: #{tpu_custom_call.1} parent=5 // pred_check
        _
      $region38: #{tpu_custom_call.1} parent=5 // pred_check_branch
        %210 = sbr.rel (%p207) target = $region40
      $region39: #{tpu_custom_call.1} parent=5 // pred_region
        %s211 = ssub.s32 %s17, 1
        %s212 = sand.u32 %s30, 1
        %s213 = scalar_lea.sflag [#allocation3], %s212
        %s214 = sand.u32 %s30, 1
        %s215 = smul.addr %s214, 32
        %s216 = scalar_lea.vmem [#allocation2], %s215
        // Predicated region
        $region41: #{tpu_custom_call.1} parent=39 // pred_check
          %p217 = pneg %p43
        $region42: #{tpu_custom_call.1} parent=39 // pred_check_branch
          %219 = sbr.rel (%p217) target = $region44
        $region43: #{tpu_custom_call.1} parent=39 // pred_region
          %220 = dma.done %s213, 512
        $region44: #{tpu_custom_call.1} parent=39 // pred_fallthru
          _
        %s221 = sand.u32 %s30, 1
        %s222 = scalar_lea.sflag [#allocation3], %s221
        %s223 = sand.u32 %s30, 1
        %s224 = smul.addr %s223, 32
        %s225 = scalar_lea.vmem [#allocation2], %s224
        %p226 = pneg %p43
        %p227 = pneg %p40
        %p228 = pneg %p64
        %p229 = pneg %p61
        %p230 = pneg %p85
        %p231 = pneg %p82
        %p232 = pneg %p106
        %p233 = pneg %p103
        %p234 = pneg %p127
        %p235 = pneg %p124
        %p236 = pneg %p153
        %p237 = pneg %p150
        %s238 = sand.u32 %s140, 1
        %s239 = scalar_lea.sflag [#allocation4], %s238
        %s240 = sand.u32 %s140, 1
        %s241 = smul.addr %s240, 32
        %s242 = scalar_lea.vmem [#allocation5], %s241
        %v243 = vld [vmem:[%s216] sm:$0xff]
        %v244 = vld [vmem:[%s216 + $0x8] sm:$0xff]
        %v245 = vld [vmem:[%s216 + $0x10] sm:$0xff]
        %v246 = vld [vmem:[%s216 + $0x18] sm:$0xff]
        %v247 = vadd.f32 %v243, %v244
        %248 = vadd.xlane.f32.xlu0 %v247
        %v249 = vpop.xlane.xlu0 %248
        %v250 = vadd.f32 %v245, %v246
        %251 = vadd.xlane.f32.xlu0 %v250
        %v252 = vpop.xlane.xlu0 %251
        %v253 = vmul.f32 %v249, 0.00390625
        %v254 = vmul.f32 %v252, 0.00390625
        %v255 = vld [vmem:[%s1] sm:$0xff]
        %v256 = vld [vmem:[%s1 + $0x8] sm:$0xff]
        %v257 = vld [vmem:[%s2] sm:$0x1]
        %v260 = vlaneseq
        %v261 = vand.u32 %v260, 127
        %v262 = vlaneseq
        %v263 = vshrl.u32 %v262, 7
        %v264 = vsub.s32 %v261, %v263
        %v265 = vrot.slane %v253, %v264
        %v266 = vadd.s32 %v261, 4294967288
        %v267 = vlaneseq
        %v268 = vshrl.u32 %v267, 7
        %v269 = vsub.s32 %v266, %v268
        %v270 = vrot.slane %v254, %v269
        %vm271 = vcmask 130112
        %v272 = vsel %vm271, %v270, %v265
        %vm273 = vcmask 130048
        %v274 = vsel %vm273, %v272, 0
        %276 = vmatprep.subr.mxu0 0.0
        %277 = vmatpush1.msra.mxu0 %v255
        %278 = vmatprep.subr.mxu0 0.0
        %279 = vmatpush1.msra.mxu0 %v256
        %280 = vmatprep.subr.mxu0 0.0
        %281 = vmatpush1.msra.mxu0 0.0
        %282 = vmatprep.subr.mxu0 0.0
        %283 = vmatpush1.msra.mxu0 0.0
        %284 = vmatprep.subr.mxu0 0.0
        %285 = vmatpush1.msra.mxu0 0.0
        %286 = vmatprep.subr.mxu0 0.0
        %287 = vmatpush1.msra.mxu0 0.0
        %288 = vmatprep.subr.mxu0 0.0
        %289 = vmatpush1.msra.mxu0 0.0
        %290 = vmatprep.subr.mxu0 0.0
        %291 = vmatpush1.msra.mxu0 0.0
        %292 = vmatprep.subr.mxu0 0.0
        %293 = vmatpush1.msra.mxu0 0.0
        %294 = vmatprep.subr.mxu0 0.0
        %295 = vmatpush1.msra.mxu0 0.0
        %296 = vmatprep.subr.mxu0 0.0
        %297 = vmatpush1.msra.mxu0 0.0
        %298 = vmatprep.subr.mxu0 0.0
        %299 = vmatpush1.msra.mxu0 0.0
        %300 = vmatprep.subr.mxu0 0.0
        %301 = vmatpush1.msra.mxu0 0.0
        %302 = vmatprep.subr.mxu0 0.0
        %303 = vmatpush1.msra.mxu0 0.0
        %304 = vmatprep.subr.mxu0 0.0
        %305 = vmatpush1.msra.mxu0 0.0
        %306 = vmatprep.subr.mxu0 0.0
        %307 = vmatpush1.msra.mxu0 0.0
        %308 = vmatprep.subr.mxu0 0.0
        %309 = vmatpush1.msra.mxu0 0.0
        %310 = vmatprep.subr.mxu0 0.0
        %311 = vmatpush1.msra.mxu0 0.0
        %312 = vmatprep.subr.mxu0 0.0
        %313 = vmatpush1.msra.mxu0 0.0
        %314 = vmatprep.subr.mxu0 0.0
        %315 = vmatpush1.msra.mxu0 0.0
        %316 = vmatprep.subr.mxu0 0.0
        %317 = vmatpush1.msra.mxu0 0.0
        %318 = vmatprep.subr.mxu0 0.0
        %319 = vmatpush1.msra.mxu0 0.0
        %320 = vmatprep.subr.mxu0 0.0
        %321 = vmatpush1.msra.mxu0 0.0
        %322 = vmatprep.subr.mxu0 0.0
        %323 = vmatpush1.msra.mxu0 0.0
        %324 = vmatprep.subr.mxu0 0.0
        %325 = vmatpush1.msra.mxu0 0.0
        %326 = vmatprep.subr.mxu0 0.0
        %327 = vmatpush1.msra.mxu0 0.0
        %328 = vmatprep.subr.mxu0 0.0
        %329 = vmatpush1.msra.mxu0 0.0
        %330 = vmatprep.subr.mxu0 0.0
        %331 = vmatpush1.msra.mxu0 0.0
        %332 = vmatprep.subr.mxu0 0.0
        %333 = vmatpush1.msra.mxu0 0.0
        %334 = vmatprep.subr.mxu0 0.0
        %335 = vmatpush1.msra.mxu0 0.0
        %336 = vmatprep.subr.mxu0 0.0
        %337 = vmatpush1.msra.mxu0 0.0
        %338 = vmatprep.subr.mxu0 0.0
        %339 = vmatpush1.msra.mxu0 0.0
        %340 = vmatprep.mubr.f32.mxu0 0.0
        %341 = vmatmul.mubr.f32.gmra.mrb[0].mxu0 %v274
        %v342 = vpop.f32.mrb[0].mxu0
        %v343 = vadd.f32 %v257, %v342
        %v344 = vpop.f32.mrb[0].mxu0
        %345 = vdwg.mxu0
        %v346 = vmax.f32 %v343, 0.0
        %v347 = vld [vmem:[%s3] sm:$0xff]
        %v348 = vld [vmem:[%s4] sm:$0x1]
        %vm349 = vcmask 64512
        %v351 = vsel %vm349, %v346, 0
        %353 = vmatprep.subr.mxu0 0.0
        %354 = vmatpush1.msra.mxu0 %v347
        %355 = vmatprep.subr.mxu0 0.0
        %356 = vmatpush1.msra.mxu0 0.0
        %357 = vmatprep.subr.mxu0 0.0
        %358 = vmatpush1.msra.mxu0 0.0
        %359 = vmatprep.subr.mxu0 0.0
        %360 = vmatpush1.msra.mxu0 0.0
        %361 = vmatprep.subr.mxu0 0.0
        %362 = vmatpush1.msra.mxu0 0.0
        %363 = vmatprep.subr.mxu0 0.0
        %364 = vmatpush1.msra.mxu0 0.0
        %365 = vmatprep.subr.mxu0 0.0
        %366 = vmatpush1.msra.mxu0 0.0
        %367 = vmatprep.subr.mxu0 0.0
        %368 = vmatpush1.msra.mxu0 0.0
        %369 = vmatprep.subr.mxu0 0.0
        %370 = vmatpush1.msra.mxu0 0.0
        %371 = vmatprep.subr.mxu0 0.0
        %372 = vmatpush1.msra.mxu0 0.0
        %373 = vmatprep.subr.mxu0 0.0
        %374 = vmatpush1.msra.mxu0 0.0
        %375 = vmatprep.subr.mxu0 0.0
        %376 = vmatpush1.msra.mxu0 0.0
        %377 = vmatprep.subr.mxu0 0.0
        %378 = vmatpush1.msra.mxu0 0.0
        %379 = vmatprep.subr.mxu0 0.0
        %380 = vmatpush1.msra.mxu0 0.0
        %381 = vmatprep.subr.mxu0 0.0
        %382 = vmatpush1.msra.mxu0 0.0
        %383 = vmatprep.subr.mxu0 0.0
        %384 = vmatpush1.msra.mxu0 0.0
        %385 = vmatprep.subr.mxu0 0.0
        %386 = vmatpush1.msra.mxu0 0.0
        %387 = vmatprep.subr.mxu0 0.0
        %388 = vmatpush1.msra.mxu0 0.0
        %389 = vmatprep.subr.mxu0 0.0
        %390 = vmatpush1.msra.mxu0 0.0
        %391 = vmatprep.subr.mxu0 0.0
        %392 = vmatpush1.msra.mxu0 0.0
        %393 = vmatprep.subr.mxu0 0.0
        %394 = vmatpush1.msra.mxu0 0.0
        %395 = vmatprep.subr.mxu0 0.0
        %396 = vmatpush1.msra.mxu0 0.0
        %397 = vmatprep.subr.mxu0 0.0
        %398 = vmatpush1.msra.mxu0 0.0
        %399 = vmatprep.subr.mxu0 0.0
        %400 = vmatpush1.msra.mxu0 0.0
        %401 = vmatprep.subr.mxu0 0.0
        %402 = vmatpush1.msra.mxu0 0.0
        %403 = vmatprep.subr.mxu0 0.0
        %404 = vmatpush1.msra.mxu0 0.0
        %405 = vmatprep.subr.mxu0 0.0
        %406 = vmatpush1.msra.mxu0 0.0
        %407 = vmatprep.subr.mxu0 0.0
        %408 = vmatpush1.msra.mxu0 0.0
        %409 = vmatprep.subr.mxu0 0.0
        %410 = vmatpush1.msra.mxu0 0.0
        %411 = vmatprep.subr.mxu0 0.0
        %412 = vmatpush1.msra.mxu0 0.0
        %413 = vmatprep.subr.mxu0 0.0
        %414 = vmatpush1.msra.mxu0 0.0
        %415 = vmatprep.subr.mxu0 0.0
        %416 = vmatpush1.msra.mxu0 0.0
        %417 = vmatprep.mubr.f32.mxu0 0.0
        %418 = vmatmul.mubr.f32.gmra.mrb[0].mxu0 %v351
        %v419 = vpop.f32.mrb[0].mxu0
        %v420 = vadd.f32 %v348, %v419
        %v421 = vpop.f32.mrb[0].mxu0
        %422 = vdwg.mxu0
        %v423 = vadd.f32 %v420, 3.0
        %v424 = vmax.f32 %v423, 0.0
        %v425 = vmin.f32 %v424, 6.0
        %v426 = vmul.f32 %v425, 0.16666667
        %v427 = vlaneseq
        %v428 = vshrl.u32 %v427, 7
        %v429 = vsub.s32 0, %v428
        %v430 = vrot.slane %v426, %v429
        %432 = vbcast.lane.b32.xlu0 %v430, 256
        %v433 = vpop.permute.xlu0 %432
        %s435 = sor.u32 256, 8
        %436 = vbcast.lane.b32.xlu0 %v430, %s435
        %v437 = vpop.permute.xlu0 %436
        %v438 = vmul.f32 %v243, %v433
        %v439 = vmul.f32 %v244, %v433
        %v440 = vmul.f32 %v245, %v437
        %v441 = vmul.f32 %v246, %v437
        %442 = vst [vmem:[%s242] sm:$0xff] %v438
        %443 = vst [vmem:[%s242 + $0x8] sm:$0xff] %v439
        %444 = vst [vmem:[%s242 + $0x10] sm:$0xff] %v440
        %445 = vst [vmem:[%s242 + $0x18] sm:$0xff] %v441
        %s446 = sand.u32 %s140, 1
        %s447 = scalar_lea.sflag [#allocation4], %s446
        %s448 = sand.u32 %s140, 1
        %s449 = smul.addr %s448, 32
        %s450 = scalar_lea.vmem [#allocation5], %s449
        // Predicated region
        $region45: #{tpu_custom_call.1} parent=39 // pred_check
          %p451 = pneg %p150
        $region46: #{tpu_custom_call.1} parent=39 // pred_check_branch
          %453 = sbr.rel (%p451) target = $region48
        $region47: #{tpu_custom_call.1} parent=39 // pred_region
          %s455 = ssub.s32 512, 512
          %456 = vsyncadd %s447, %s455
          %s457 = smul.addr %s22, 4
          %s458 = smul.addr %s457, 128
          %s459 = scalar_lea.hbm %s5, %s458
          %s460 = sshll.u32 %s450, 4
          %s461 = int_to_ptr.vmem [resolvable:$true] %s460
          %466 = dma.vmem_to_hbm [thread:$0]  %s461, 512, %s459, %s447, 256, 256, 16
        $region48: #{tpu_custom_call.1} parent=39 // pred_fallthru
          _
      $region40: #{tpu_custom_call.1} parent=5 // pred_fallthru
        _
      %p467 = scmp.le.s32.totalorder 2, %s17
      // Predicated region
      $region49: #{tpu_custom_call.1} parent=5 // pred_check
        %p468 = pneg %p467
      $region50: #{tpu_custom_call.1} parent=5 // pred_check_branch
        %470 = sbr.rel (%p468) target = $region52
      $region51: #{tpu_custom_call.1} parent=5 // pred_region
        %s471 = ssub.s32 %s17, 2
        // Predicated region
        $region53: #{tpu_custom_call.1} parent=51 // pred_check
          %p472 = pneg %p156
        $region54: #{tpu_custom_call.1} parent=51 // pred_check_branch
          %474 = sbr.rel (%p472) target = $region56
        $region55: #{tpu_custom_call.1} parent=51 // pred_region
          %s475 = sand.u32 %s141, 1
          %s476 = scalar_lea.sflag [#allocation4], %s475
          %s477 = sand.u32 %s141, 1
          %s478 = smul.addr %s477, 32
          %s479 = scalar_lea.vmem [#allocation5], %s478
          %480 = dma.done %s476, 512
        $region56: #{tpu_custom_call.1} parent=51 // pred_fallthru
          _
      $region52: #{tpu_custom_call.1} parent=5 // pred_fallthru
        _
    $region6: #{tpu_custom_call.1} parent=1 // loop_footer
      %s21 = sadd.s32 1, %s17
    $region7: #{tpu_custom_call.1} parent=1 // loop_footer_branch
      %16 = sbr.rel target = $region3
    $region8: #{tpu_custom_call.1} parent=1 // loop_exit
      _
    %481 = vsyncpa [#allocation3], 1
    %s482 = scalar_lea.sflag [#allocation3], 1
    %483 = vsyncpa %s482, 1
    %484 = vsyncpa [#allocation4], 1
    %s485 = scalar_lea.sflag [#allocation4], 1
    %486 = vsyncpa %s485, 1

</llo_original>
